<compile_context>
chip_gen: v7x
topology: tpu7x:2x2x1
jax: 0.10.0
libtpu: 0.0.40
codegen_flags: <defaults>
</compile_context>

<pallas_src>
import math

import jax
import jax.numpy as jnp
from jax.experimental import pallas as pl
from jax.experimental.pallas import tpu as pltpu


_VMEM_BUDGET = 20 * 1024 * 1024      # per-step tile budget (fits v7x scoped VMEM)
_VMEM_LIMIT_CAP = 48 * 1024 * 1024   # never request more than this (v7x: 64 MiB phys)


# ---------------------------------------------------------------------------
# Packed (block-diagonal) path: one lane-dense matmul covering all n layers.
# ---------------------------------------------------------------------------
def _packed_kernel_bias(x_ref, w_ref, b_ref, o_ref):
    # x_ref: (TB, n*in_f)  w_ref: (n*in_f, n*out_f)  b_ref: (1, n*out_f)
    y = jnp.dot(x_ref[...], w_ref[...], preferred_element_type=jnp.float32)
    y = y + b_ref[...].astype(jnp.float32)
    o_ref[...] = y.astype(o_ref.dtype)


def _packed_kernel_nobias(x_ref, w_ref, o_ref):
    y = jnp.dot(x_ref[...], w_ref[...], preferred_element_type=jnp.float32)
    o_ref[...] = y.astype(o_ref.dtype)


# ---------------------------------------------------------------------------
# General path: per-layer matmul with batch / out / K tiling + f32 accumulator.
# ---------------------------------------------------------------------------
def _general_kernel_bias(x_ref, w_ref, b_ref, o_ref, acc_ref):
    # x_ref: (1, TB, TK)  w_ref: (1, TK, TN)  b_ref: (1, 1, TN)
    # o_ref: (1, TB, TN)  acc_ref: (TB, TN) float32
    k = pl.program_id(3)

    @pl.when(k == 0)
    def _init():
        acc_ref[...] = jnp.zeros_like(acc_ref)

    acc_ref[...] += jnp.dot(x_ref[0], w_ref[0], preferred_element_type=jnp.float32)

    @pl.when(k == pl.num_programs(3) - 1)
    def _finalize():
        o_ref[0] = (acc_ref[...] + b_ref[0].astype(jnp.float32)).astype(o_ref.dtype)


def _general_kernel_nobias(x_ref, w_ref, o_ref, acc_ref):
    k = pl.program_id(3)

    @pl.when(k == 0)
    def _init():
        acc_ref[...] = jnp.zeros_like(acc_ref)

    acc_ref[...] += jnp.dot(x_ref[0], w_ref[0], preferred_element_type=jnp.float32)

    @pl.when(k == pl.num_programs(3) - 1)
    def _finalize():
        o_ref[0] = acc_ref[...].astype(o_ref.dtype)


# ---------------------------------------------------------------------------
# Tile selection helpers.
# ---------------------------------------------------------------------------
def _pick_feature_tile(dim: int) -> int:
    """Tile a feature dim to a 128-multiple chunk, or keep it whole."""
    if dim <= 512:
        return dim
    for t in (512, 256, 128):
        if dim % t == 0:
            return t
    # TODO(synk): feature dims > 512 that are not multiples of 128 are kept
    # whole (splitting them safely would need masked edge tiles).
    return dim


def _pick_batch_tile(batch: int, fixed_bytes: int, bytes_per_row: int) -> int:
    if batch <= 8:
        return batch
    tb = (_VMEM_BUDGET - fixed_bytes) // max(bytes_per_row, 1)
    tb = int(max(8, min(1024, tb)))
    tb = (tb // 8) * 8                 # multiple of 8 (sublane alignment)
    if tb >= batch:
        return batch                   # a full-dim block always satisfies (8,128)
    return tb


def _compiler_params(n_parallel: int, n_arbitrary: int, est_bytes: int):
    limit = int(min(max(32 * 1024 * 1024, 2 * est_bytes), _VMEM_LIMIT_CAP))
    return pltpu.CompilerParams(
        dimension_semantics=("parallel",) * n_parallel + ("arbitrary",) * n_arbitrary,
        vmem_limit_bytes=limit,
    )


# ---------------------------------------------------------------------------
# Wrappers.
# ---------------------------------------------------------------------------
def _nlinear_packed(x3, weight, bias, batch, n, in_f, out_f):
    dtype = x3.dtype
    isz = dtype.itemsize
    K, N = n * in_f, n * out_f

    x2 = x3.reshape(batch, K)                         # contiguous reshape -> free
    eye = jnp.eye(n, dtype=weight.dtype)
    w_bd = jnp.einsum("ab,aio->aibo", eye, weight).reshape(K, N)  # block-diagonal

    fixed = 2 * (K * N + N) * isz                     # double-buffered weight + bias
    per_row = 2 * (K + N) * isz                       # double-buffered x + out per row
    tb = _pick_batch_tile(batch, fixed, per_row)
    grid = (pl.cdiv(batch, tb),)

    in_specs = [
        pl.BlockSpec((tb, K), lambda b: (b, 0)),
        pl.BlockSpec((K, N), lambda b: (0, 0)),       # constant index -> fetched once
    ]
    operands = [x2, w_bd]
    if bias is not None:
        in_specs.append(pl.BlockSpec((1, N), lambda b: (0, 0)))
        operands.append(bias.reshape(1, N))
        kernel = _packed_kernel_bias
    else:
        kernel = _packed_kernel_nobias

    est = fixed + tb * per_row
    out2 = pl.pallas_call(
        kernel,
        out_shape=jax.ShapeDtypeStruct((batch, N), dtype),
        grid_spec=pltpu.PrefetchScalarGridSpec(
            num_scalar_prefetch=0,
            grid=grid,
            in_specs=in_specs,
            out_specs=pl.BlockSpec((tb, N), lambda b: (b, 0)),
        ),
        compiler_params=_compiler_params(1, 0, est),
    )(*operands)
    return out2.reshape(batch, n, out_f)              # contiguous reshape -> free


def _nlinear_general(x3, weight, bias, batch, n, in_f, out_f):
    dtype = x3.dtype
    isz = dtype.itemsize

    # Layer-major layout so every grid step is a clean 2-D (TB,TK)x(TK,TN) MXU
    # matmul addressed with simple leading-dim indexing.
    # TODO(synk): this transpose (and its inverse on the output) is one extra
    # HBM round trip each; callers that can keep activations in (n, B, f)
    # layout should feed that layout directly.
    xt = jnp.transpose(x3, (1, 0, 2))                 # (n, B, in_f)

    tk = _pick_feature_tile(in_f)
    tn = _pick_feature_tile(out_f)
    fixed = 2 * (tk * tn + tn) * isz                  # double-buffered weight + bias
    per_row = 2 * (tk + tn) * isz + 4 * tn            # x + out (2x) + f32 acc row
    tb = _pick_batch_tile(batch, fixed, per_row)

    grid = (n, pl.cdiv(batch, tb), pl.cdiv(out_f, tn), pl.cdiv(in_f, tk))

    in_specs = [
        pl.BlockSpec((1, tb, tk), lambda i, b, j, k: (i, b, k)),
        pl.BlockSpec((1, tk, tn), lambda i, b, j, k: (i, k, j)),
    ]
    operands = [xt, weight]
    if bias is not None:
        in_specs.append(pl.BlockSpec((1, 1, tn), lambda i, b, j, k: (i, 0, j)))
        operands.append(bias.reshape(n, 1, out_f))
        kernel = _general_kernel_bias
    else:
        kernel = _general_kernel_nobias

    est = fixed + tb * per_row
    out_t = pl.pallas_call(
        kernel,
        out_shape=jax.ShapeDtypeStruct((n, batch, out_f), dtype),
        grid_spec=pltpu.PrefetchScalarGridSpec(
            num_scalar_prefetch=0,
            grid=grid,
            in_specs=in_specs,
            out_specs=pl.BlockSpec((1, tb, tn), lambda i, b, j, k: (i, b, j)),
            scratch_shapes=[pltpu.VMEM((tb, tn), jnp.float32)],
        ),
        compiler_params=_compiler_params(3, 1, est),
    )(*operands)
    return jnp.transpose(out_t, (1, 0, 2))            # (B, n, out_f)


def nlinear_pallas(x, weight, bias=None):
    """Apply n separate linear layers: (*, n, in_f) -> (*, n, out_f)."""
    n, in_f, out_f = weight.shape
    lead = x.shape[:-2]
    assert x.shape[-2] == n and x.shape[-1] == in_f

    batch = 1
    for d in lead:
        batch *= d
    out_shape = (*lead, n, out_f)
    if batch == 0:
        return jnp.zeros(out_shape, dtype=x.dtype)

    x3 = x.reshape(batch, n, in_f)                    # contiguous reshape -> free
    isz = x.dtype.itemsize
    K, N = n * in_f, n * out_f
    use_packed = (K <= 2048) and (N <= 2048) and (2 * K * N * isz <= 8 * 1024 * 1024)
    if use_packed:
        out3 = _nlinear_packed(x3, weight, bias, batch, n, in_f, out_f)
    else:
        out3 = _nlinear_general(x3, weight, bias, batch, n, in_f, out_f)
    return out3.reshape(out_shape)


def init_nlinear_params(key, n, in_features, out_features, dtype=jnp.float32):
    """Deterministic init mirroring NLinear.reset_parameters.

    kaiming_uniform_(a=sqrt(5)) on a (n, in, out) tensor reduces to
    uniform(-1/sqrt(fan_in), 1/sqrt(fan_in)) with fan_in = in * out
    (PyTorch's fan convention for a 3-D tensor), same bound for the bias.
    """
    kw, kb = jax.random.split(key)
    fan_in = in_features * out_features
    bound = 1.0 / math.sqrt(fan_in) if fan_in > 0 else 0.0
    weight = jax.random.uniform(
        kw, (n, in_features, out_features), dtype=dtype, minval=-bound, maxval=bound
    )
    bias = jax.random.uniform(
        kb, (n, out_features), dtype=dtype, minval=-bound, maxval=bound
    )
    return weight, bias


if __name__ == "__main__":
    key = jax.random.PRNGKey(0)
    k_x, k_p, k_x2, k_p2 = jax.random.split(key, 4)

    # --- Small-feature case (packed block-diagonal path), module example shape.
    batch, extra, n, in_f, out_f = 2, 5, 3, 4, 6
    x = jax.random.normal(k_x, (batch, extra, n, in_f), dtype=jnp.float32)
    weight, bias = init_nlinear_params(k_p, n, in_f, out_f)

    out = jax.block_until_ready(nlinear_pallas(x, weight, bias))
    ref = jnp.einsum("beni,nio->beno", x, weight) + bias[None, None, :, :]
    assert out.shape == (batch, extra, n, out_f)
    assert jnp.allclose(out, ref, atol=1e-5, rtol=1e-5)

    out_nb = jax.block_until_ready(nlinear_pallas(x, weight, None))
    ref_nb = jnp.einsum("beni,nio->beno", x, weight)
    assert jnp.allclose(out_nb, ref_nb, atol=1e-5, rtol=1e-5)

    # --- Larger-feature case (general path with batch / K tiling + accumulator).
    n2, in2, out2_f, b2 = 8, 1024, 128, 48
    x2 = jax.random.normal(k_x2, (b2, n2, in2), dtype=jnp.float32)
    w2, bi2 = init_nlinear_params(k_p2, n2, in2, out2_f)

    y2 = jax.block_until_ready(nlinear_pallas(x2, w2, bi2))
    ref2 = jnp.einsum("bni,nio->bno", x2, w2) + bi2[None, :, :]
    assert y2.shape == (b2, n2, out2_f)
    assert jnp.allclose(y2, ref2, atol=2e-3, rtol=2e-3)

    y2_nb = jax.block_until_ready(nlinear_pallas(x2, w2, None))
    ref2_nb = jnp.einsum("bni,nio->bno", x2, w2)
    assert jnp.allclose(y2_nb, ref2_nb, atol=2e-3, rtol=2e-3)

    print("KERNEL_OK")
</pallas_src>

<mosaic_0001>
module attributes {stable_mosaic.version = 11 : i64} {
  func.func @_packed_kernel_bias(%arg0: i32, %arg1: memref<10x12xf32, #tpu.memory_space<vmem>>, %arg2: memref<12x18xf32, #tpu.memory_space<vmem>>, %arg3: memref<1x18xf32, #tpu.memory_space<vmem>>, %arg4: memref<10x18xf32, #tpu.memory_space<vmem>>) attributes {dimension_semantics = [#tpu.dimension_semantics<parallel>], iteration_bounds = array<i64: 1>, scalar_prefetch = 0 : i64, scratch_operands = 0 : i64, tpu.core_type = #tpu.core_type<tc>, window_params = [{transform_indices = @transform_0, window_bounds = array<i64: 10, 12>}, {pipeline_mode = #tpu.pipeline_mode<synchronous>, transform_indices = @transform_1, window_bounds = array<i64: 12, 18>}, {pipeline_mode = #tpu.pipeline_mode<synchronous>, transform_indices = @transform_2, window_bounds = array<i64: 1, 18>}, {transform_indices = @transform_3, window_bounds = array<i64: 10, 18>}]} {
    %c0 = arith.constant 0 : index
    %c0_0 = arith.constant 0 : index
    %0 = vector.load %arg1[%c0, %c0_0] : memref<10x12xf32, #tpu.memory_space<vmem>>, vector<10x12xf32>
    %c0_1 = arith.constant 0 : index
    %c0_2 = arith.constant 0 : index
    %1 = vector.load %arg2[%c0_1, %c0_2] : memref<12x18xf32, #tpu.memory_space<vmem>>, vector<12x18xf32>
    %cst = arith.constant dense<0.000000e+00> : vector<10x18xf32>
    %2 = tpu.matmul %0, %1, %cst {dimension_numbers = #tpu.dot_dimension_numbers<[1], [0], [0], [1], [0, 0, 1, 1], [], []>} : vector<10x12xf32>, vector<12x18xf32>, vector<10x18xf32> -> vector<10x18xf32>
    %c0_3 = arith.constant 0 : index
    %c0_4 = arith.constant 0 : index
    %3 = vector.load %arg3[%c0_3, %c0_4] : memref<1x18xf32, #tpu.memory_space<vmem>>, vector<1x18xf32>
    %4 = vector.broadcast %3 : vector<1x18xf32> to vector<10x18xf32>
    %5 = arith.addf %2, %4 : vector<10x18xf32>
    %c0_5 = arith.constant 0 : index
    %c0_6 = arith.constant 0 : index
    %6 = vector.load %arg4[%c0_5, %c0_6] : memref<10x18xf32, #tpu.memory_space<vmem>>, vector<10x18xf32>
    tpu.vector_store %arg4[%c0_5, %c0_6], %5 {strides = array<i32>} : memref<10x18xf32, #tpu.memory_space<vmem>>, vector<10x18xf32>,
    return
  }
  func.func @transform_0(%arg0: i32) -> (i32, i32) {
    %c0_i32 = arith.constant 0 : i32
    %c0_i32_0 = arith.constant 0 : i32
    return %arg0, %c0_i32 : i32, i32
  }
  func.func @transform_1(%arg0: i32) -> (i32, i32) {
    %c0_i32 = arith.constant 0 : i32
    %c0_i32_0 = arith.constant 0 : i32
    %c0_i32_1 = arith.constant 0 : i32
    return %c0_i32, %c0_i32_0 : i32, i32
  }
  func.func @transform_2(%arg0: i32) -> (i32, i32) {
    %c0_i32 = arith.constant 0 : i32
    %c0_i32_0 = arith.constant 0 : i32
    %c0_i32_1 = arith.constant 0 : i32
    return %c0_i32, %c0_i32_0 : i32, i32
  }
  func.func @transform_3(%arg0: i32) -> (i32, i32) {
    %c0_i32 = arith.constant 0 : i32
    %c0_i32_0 = arith.constant 0 : i32
    return %arg0, %c0_i32 : i32, i32
  }
}

</mosaic_0001>

<llo_original>
// kernel: tpu_custom_call.1
$region0: #{tpu_custom_call.1}
  #allocation0 [shape = 'u32[]', space=smem, size = 0x4, offset = 0x4, fixed_abs, tag = 'smem constant byte address 0x4 - core index']
  #allocation1 [shape = 'u32[144,128]{1,0:T(1,128)}', space=vmem, size = 0x12000, scoped, tag = 'internal scratch']
  %s0 = inlined_call_operand.hbm [shape: f32[10,12], index: 0, kind: input, shape index: {}]
  %s1 = inlined_call_operand.hbm [shape: f32[12,18], index: 1, kind: input, shape index: {}]
  %s2 = inlined_call_operand.vmem [shape: f32[1,18], index: 2, kind: input, shape index: {}]
  %s3 = inlined_call_operand.hbm [shape: f32[10,18], index: 3, kind: output, shape index: {}]
  %s4 = sld [smem:[#allocation0]]
  $region30: #{tpu_custom_call.1} parent=0
    _
  %s6 = ssub.s32 1, %s4
  %s7 = scalar_select 0, %s6, %s4
  $region1: #{tpu_custom_call.1} parent=0
    #allocation2 [shape = 'u8[8192]{0}', space=vmem, size = 0x2000, scoped, tag = 'input window, operand 0, single buffered']
    #allocation3 [shape = 's32[1]{0}', space=sflag, size = 0x4, scoped, tag = 'scoped memory for tpu_custom_call.1']
    #allocation4 [shape = 's32[1]{0}', space=sflag, size = 0x4, scoped, tag = 'scoped memory for tpu_custom_call.1']
    #allocation5 [shape = 'u8[8192]{0}', space=vmem, size = 0x2000, scoped, tag = 'input window, operand 1, single buffered']
    #allocation6 [shape = 's32[1]{0}', space=sflag, size = 0x4, scoped, tag = 'scoped memory for tpu_custom_call.1']
    #allocation7 [shape = 'u8[8192]{0}', space=vmem, size = 0x2000, scoped, tag = 'output window, operand 0, single buffered']
    %8 = vsyncpa [#allocation3], 0
    %9 = vsyncpa [#allocation6], 0
    %10 = vsyncpa [#allocation4], 0
    // Predicated region
    $region2: #{tpu_custom_call.1} parent=1 // pred_check
      _
    $region3: #{tpu_custom_call.1} parent=1 // pred_check_branch
      %12 = sbr.rel (0) target = $region5
    $region4: #{tpu_custom_call.1} parent=1 // pred_region
      %s14 = ssub.s32 256, 256
      %15 = vsyncadd [#allocation3], %s14
      %s16 = sshll.u32 [#allocation2], 4
      %s17 = int_to_ptr.vmem [resolvable:$true] %s16
      %22 = dma.hbm_to_vmem [thread:$0]  %s0, 256, %s17, [#allocation3], 128, 128, 8
    $region5: #{tpu_custom_call.1} parent=1 // pred_fallthru
      _
    // Predicated region
    $region6: #{tpu_custom_call.1} parent=1 // pred_check
      _
    $region7: #{tpu_custom_call.1} parent=1 // pred_check_branch
      %24 = sbr.rel (0) target = $region9
    $region8: #{tpu_custom_call.1} parent=1 // pred_region
      %s26 = ssub.s32 256, 256
      %27 = vsyncadd [#allocation6], %s26
      %s28 = sshll.u32 [#allocation5], 4
      %s29 = int_to_ptr.vmem [resolvable:$true] %s28
      %34 = dma.hbm_to_vmem [thread:$0]  %s1, 256, %s29, [#allocation6], 128, 128, 8
    $region9: #{tpu_custom_call.1} parent=1 // pred_fallthru
      _
    // Predicated region
    $region10: #{tpu_custom_call.1} parent=1 // pred_check
      _
    $region11: #{tpu_custom_call.1} parent=1 // pred_check_branch
      %36 = sbr.rel (0) target = $region13
    $region12: #{tpu_custom_call.1} parent=1 // pred_region
      _
    $region13: #{tpu_custom_call.1} parent=1 // pred_fallthru
      _
    // Predicated region
    $region14: #{tpu_custom_call.1} parent=1 // pred_check
      _
    $region15: #{tpu_custom_call.1} parent=1 // pred_check_branch
      %38 = sbr.rel (0) target = $region17
    $region16: #{tpu_custom_call.1} parent=1 // pred_region
      %39 = dma.done [#allocation3], 256
    $region17: #{tpu_custom_call.1} parent=1 // pred_fallthru
      _
    // Predicated region
    $region18: #{tpu_custom_call.1} parent=1 // pred_check
      _
    $region19: #{tpu_custom_call.1} parent=1 // pred_check_branch
      %41 = sbr.rel (0) target = $region21
    $region20: #{tpu_custom_call.1} parent=1 // pred_region
      %42 = dma.done [#allocation6], 256
    $region21: #{tpu_custom_call.1} parent=1 // pred_fallthru
      _
    %v43 = vld [vmem:[#allocation2] sm:$0xff]
    %v44 = vld [vmem:[#allocation2 + $0x8] sm:$0x3]
    %v45 = vld [vmem:[#allocation5] sm:$0xff]
    %v46 = vld [vmem:[#allocation5 + $0x8] sm:$0xf]
    %v47 = vld [vmem:[%s2] sm:$0x1]
    %v49 = vlaneseq
    %v50 = vshrl.u32 %v49, 7
    %v51 = vsub.s32 0, %v50
    %v52 = vrot.slane %v47, %v51
    %vm54 = vcmask 97280
    %v56 = vsel %vm54, %v43, 0
    %v59 = vsel %vm54, %v44, 0
    %vm61 = vcmask 1043456
    %v63 = vsel %vm61, %v46, 0
    %65 = vmatprep.subr.mxu0 0.0
    %66 = vmatpush1.msra.mxu0 %v45
    %67 = vmatprep.subr.mxu0 0.0
    %68 = vmatpush1.msra.mxu0 %v63
    %69 = vmatprep.subr.mxu0 0.0
    %70 = vmatpush1.msra.mxu0 0.0
    %71 = vmatprep.subr.mxu0 0.0
    %72 = vmatpush1.msra.mxu0 0.0
    %73 = vmatprep.subr.mxu0 0.0
    %74 = vmatpush1.msra.mxu0 0.0
    %75 = vmatprep.subr.mxu0 0.0
    %76 = vmatpush1.msra.mxu0 0.0
    %77 = vmatprep.subr.mxu0 0.0
    %78 = vmatpush1.msra.mxu0 0.0
    %79 = vmatprep.subr.mxu0 0.0
    %80 = vmatpush1.msra.mxu0 0.0
    %81 = vmatprep.subr.mxu0 0.0
    %82 = vmatpush1.msra.mxu0 0.0
    %83 = vmatprep.subr.mxu0 0.0
    %84 = vmatpush1.msra.mxu0 0.0
    %85 = vmatprep.subr.mxu0 0.0
    %86 = vmatpush1.msra.mxu0 0.0
    %87 = vmatprep.subr.mxu0 0.0
    %88 = vmatpush1.msra.mxu0 0.0
    %89 = vmatprep.subr.mxu0 0.0
    %90 = vmatpush1.msra.mxu0 0.0
    %91 = vmatprep.subr.mxu0 0.0
    %92 = vmatpush1.msra.mxu0 0.0
    %93 = vmatprep.subr.mxu0 0.0
    %94 = vmatpush1.msra.mxu0 0.0
    %95 = vmatprep.subr.mxu0 0.0
    %96 = vmatpush1.msra.mxu0 0.0
    %97 = vmatprep.subr.mxu0 0.0
    %98 = vmatpush1.msra.mxu0 0.0
    %99 = vmatprep.subr.mxu0 0.0
    %100 = vmatpush1.msra.mxu0 0.0
    %101 = vmatprep.subr.mxu0 0.0
    %102 = vmatpush1.msra.mxu0 0.0
    %103 = vmatprep.subr.mxu0 0.0
    %104 = vmatpush1.msra.mxu0 0.0
    %105 = vmatprep.subr.mxu0 0.0
    %106 = vmatpush1.msra.mxu0 0.0
    %107 = vmatprep.subr.mxu0 0.0
    %108 = vmatpush1.msra.mxu0 0.0
    %109 = vmatprep.subr.mxu0 0.0
    %110 = vmatpush1.msra.mxu0 0.0
    %111 = vmatprep.subr.mxu0 0.0
    %112 = vmatpush1.msra.mxu0 0.0
    %113 = vmatprep.subr.mxu0 0.0
    %114 = vmatpush1.msra.mxu0 0.0
    %115 = vmatprep.subr.mxu0 0.0
    %116 = vmatpush1.msra.mxu0 0.0
    %117 = vmatprep.subr.mxu0 0.0
    %118 = vmatpush1.msra.mxu0 0.0
    %119 = vmatprep.subr.mxu0 0.0
    %120 = vmatpush1.msra.mxu0 0.0
    %121 = vmatprep.subr.mxu0 0.0
    %122 = vmatpush1.msra.mxu0 0.0
    %123 = vmatprep.subr.mxu0 0.0
    %124 = vmatpush1.msra.mxu0 0.0
    %125 = vmatprep.subr.mxu0 0.0
    %126 = vmatpush1.msra.mxu0 0.0
    %127 = vmatprep.subr.mxu0 0.0
    %128 = vmatpush1.msra.mxu0 0.0
    %129 = vmatprep.mubr.f32.mxu0 0.0
    %130 = vmatmul.mubr.f32.gmra.mrb[0].mxu0 %v56
    %v131 = vpop.f32.mrb[0].mxu0
    %v132 = vadd.f32 %v52, %v131
    %v133 = vpop.f32.mrb[0].mxu0
    %134 = vmatprep.mubr.f32.mxu0 0.0
    %135 = vmatmul.mubr.f32.gmra.mrb[0].mxu0 %v59
    %v136 = vpop.f32.mrb[0].mxu0
    %v137 = vadd.f32 %v52, %v136
    %v138 = vpop.f32.mrb[0].mxu0
    %139 = vdwg.mxu0
    %vm140 = vcmask 146432
    %141 = vst.msk [vmem:[#allocation7] sm:$0xff] %vm140, %v132
    %vm142 = vcmask 140288
    %143 = vst.msk [vmem:[#allocation7 + $0x8] sm:$0x3] %vm142, %v137
    // Predicated region
    $region22: #{tpu_custom_call.1} parent=1 // pred_check
      _
    $region23: #{tpu_custom_call.1} parent=1 // pred_check_branch
      %145 = sbr.rel (0) target = $region25
    $region24: #{tpu_custom_call.1} parent=1 // pred_region
      %s147 = ssub.s32 256, 256
      %148 = vsyncadd [#allocation4], %s147
      %s149 = sshll.u32 [#allocation7], 4
      %s150 = int_to_ptr.vmem [resolvable:$true] %s149
      %155 = dma.vmem_to_hbm [thread:$0]  %s150, 256, %s3, [#allocation4], 128, 128, 8
    $region25: #{tpu_custom_call.1} parent=1 // pred_fallthru
      _
    // Predicated region
    $region26: #{tpu_custom_call.1} parent=1 // pred_check
      _
    $region27: #{tpu_custom_call.1} parent=1 // pred_check_branch
      %157 = sbr.rel (0) target = $region29
    $region28: #{tpu_custom_call.1} parent=1 // pred_region
      %158 = dma.done [#allocation4], 256
    $region29: #{tpu_custom_call.1} parent=1 // pred_fallthru
      _
    %159 = vsyncpa [#allocation3], 1
    %160 = vsyncpa [#allocation6], 1
    %161 = vsyncpa [#allocation4], 1

</llo_original>
